<compile_context>
chip_gen: v5e
topology: v5e:2x2
jax: 0.10.0
libtpu: 0.0.40
codegen_flags: <defaults>
</compile_context>

<pallas_src>
import jax
import jax.numpy as jnp
from jax.experimental import pallas as pl
from jax.experimental.pallas import tpu as pltpu


def _round_up(a, b):
    return (a + b - 1) // b * b


# --------------------------------------------------------------------------
# Kernels
# --------------------------------------------------------------------------
def ffn_resident_kernel(x_ref, w1_ref, b1_ref, w2_ref, b2_ref, o_ref):
    """Weight-stationary path: full hidden dim per step (grid over rows only)."""
    h = jnp.dot(x_ref[...], w1_ref[...], preferred_element_type=jnp.float32)
    h = jnp.maximum(h + b1_ref[...], 0.0)
    y = jnp.dot(h.astype(w2_ref.dtype), w2_ref[...],
                preferred_element_type=jnp.float32) + b2_ref[...]
    o_ref[...] = y.astype(o_ref.dtype)


def ffn_tiled_accout_kernel(x_ref, w1_ref, b1_ref, w2_ref, b2_ref, o_ref):
    """Hidden-tiled path, f32 output: accumulate directly into the resident
    output block (its block index is constant along k)."""
    k = pl.program_id(1)
    h = jnp.dot(x_ref[...], w1_ref[...], preferred_element_type=jnp.float32)
    h = jnp.maximum(h + b1_ref[...], 0.0)
    partial = jnp.dot(h.astype(w2_ref.dtype), w2_ref[...],
                      preferred_element_type=jnp.float32)

    @pl.when(k == 0)
    def _first():
        o_ref[...] = partial + b2_ref[...]

    @pl.when(k > 0)
    def _rest():
        o_ref[...] += partial


def ffn_tiled_scratch_kernel(x_ref, w1_ref, b1_ref, w2_ref, b2_ref, o_ref, acc_ref):
    """Hidden-tiled path, non-f32 output: f32 VMEM scratch accumulator."""
    k = pl.program_id(1)
    h = jnp.dot(x_ref[...], w1_ref[...], preferred_element_type=jnp.float32)
    h = jnp.maximum(h + b1_ref[...], 0.0)
    partial = jnp.dot(h.astype(w2_ref.dtype), w2_ref[...],
                      preferred_element_type=jnp.float32)

    @pl.when(k == 0)
    def _first():
        acc_ref[...] = partial + b2_ref[...]

    @pl.when(k > 0)
    def _rest():
        acc_ref[...] += partial

    @pl.when(k == pl.num_programs(1) - 1)
    def _finalize():
        o_ref[...] = acc_ref[...].astype(o_ref.dtype)


# --------------------------------------------------------------------------
# Wrapper
# --------------------------------------------------------------------------
def feed_forward(x, w1, b1, w2, b2, *, use_bf16=True,
                 force_weight_tiling=False, th_max=None):
    """relu(x @ w1 + b1) @ w2 + b2, fused.  x: (B, T, C) -> (B, T, C)."""
    B, T, C = x.shape
    H = w1.shape[1]                      # 4 * C
    M = B * T
    out_dtype = x.dtype
    in_dtype = jnp.bfloat16 if use_bf16 else x.dtype
    isz = jnp.dtype(in_dtype).itemsize
    osz = jnp.dtype(out_dtype).itemsize

    # ---- hardware-aware VMEM budget --------------------------------------
    try:
        vmem_cap = int(pltpu.get_tpu_info().vmem_capacity_bytes)
    except Exception:
        vmem_cap = 64 << 20              # conservative (v7x-sized) fallback
    big_vmem = vmem_cap >= (100 << 20)   # v5e / v6e (128 MiB)
    budget = int(vmem_cap * 0.75)        # leave headroom for compiler scratch

    def _residency(tm_, th_, kt_):
        b = 2 * (tm_ * C * isz           # x tile (double-buffered)
                 + C * th_ * isz         # W1 tile
                 + th_ * 4               # b1 tile
                 + th_ * C * isz         # W2 tile
                 + C * 4                 # b2
                 + tm_ * C * osz)        # output tile
        if kt_ > 1 and osz != 4:
            b += tm_ * C * 4             # f32 accumulator scratch
        b += tm_ * th_ * 4               # f32 hidden intermediate
        return b

    # ---- row tile (MXU-aligned, >=2 tiles for megacore when M is big) ----
    tm_target = 1024 if big_vmem else 512
    if M < 512:
        tm = _round_up(M, 16 if use_bf16 else 8)      # single row tile
    else:
        nt = max(pl.cdiv(M, tm_target), 2)            # >=2 => both v7x TCs busy
        tm = _round_up(pl.cdiv(M, nt), 256)
        tm128 = _round_up(pl.cdiv(M, nt), 128)        # bound padding waste
        if pl.cdiv(M, tm128) * tm128 < pl.cdiv(M, tm) * tm:
            tm = tm128

    # ---- hidden tiling: weight-stationary fast path when it fits ----------
    resident = (not force_weight_tiling) and (_residency(tm, H, 1) <= budget)
    if resident:
        Hp, th, kt = H, H, 1
    else:
        Hp = _round_up(H, 128)
        th_target = th_max if th_max is not None else (1024 if big_vmem else 512)
        th_target = max(128, (th_target // 128) * 128)
        th = 128
        for cand in range(min(th_target, Hp), 127, -128):
            if Hp % cand == 0:
                th = cand
                break
        # shrink tiles (rows first, then hidden) until residency fits budget
        while _residency(tm, th, Hp // th) > budget:
            if tm >= 512:
                tm //= 2
            elif th > 128:
                th2 = th - 128
                while th2 > 128 and Hp % th2 != 0:
                    th2 -= 128
                th = th2 if Hp % th2 == 0 else 128
            else:
                break
        kt = Hp // th

    mt = pl.cdiv(M, tm)
    Mp = mt * tm
    resid = _residency(tm, Hp if kt == 1 else th, kt)
    vmem_limit = int(min(max(int(resid * 1.25), 32 << 20), int(vmem_cap * 0.9)))

    # ---- operand prep (casts only when needed; params may be pre-cast) ----
    x2 = x.reshape(M, C)
    if x2.dtype != in_dtype:
        x2 = x2.astype(in_dtype)
    if Mp != M:
        x2 = jnp.pad(x2, ((0, Mp - M), (0, 0)))
    w1c = w1 if w1.dtype == in_dtype else w1.astype(in_dtype)
    w2c = w2 if w2.dtype == in_dtype else w2.astype(in_dtype)
    b1_2 = b1.reshape(1, H).astype(jnp.float32)
    b2_2 = b2.reshape(1, C).astype(jnp.float32)
    if Hp != H:   # zero-pad hidden dim: relu(0 + 0) @ 0-rows contributes nothing
        w1c = jnp.pad(w1c, ((0, 0), (0, Hp - H)))
        b1_2 = jnp.pad(b1_2, ((0, 0), (0, Hp - H)))
        w2c = jnp.pad(w2c, ((0, Hp - H), (0, 0)))

    cost = pl.CostEstimate(
        flops=4 * Mp * C * Hp,           # two GEMMs of 2*M*C*H flops each
        transcendentals=0,
        bytes_accessed=(Mp * C * isz + 2 * C * Hp * isz + Hp * 4 + C * 4
                        + Mp * C * osz),
    )

    if kt == 1:
        grid = (mt,)
        in_specs = [
            pl.BlockSpec((tm, C), lambda i: (i, 0)),     # x row tile
            pl.BlockSpec((C, Hp), lambda i: (0, 0)),     # W1 (grid-invariant)
            pl.BlockSpec((1, Hp), lambda i: (0, 0)),     # b1
            pl.BlockSpec((Hp, C), lambda i: (0, 0)),     # W2 (grid-invariant)
            pl.BlockSpec((1, C),  lambda i: (0, 0)),     # b2
        ]
        out_specs = pl.BlockSpec((tm, C), lambda i: (i, 0))
        kernel = ffn_resident_kernel
        scratch = []
        dim_sem = ("parallel",)
    else:
        grid = (mt, kt)                                  # rows, hidden (reduction last)
        in_specs = [
            pl.BlockSpec((tm, C), lambda i, k: (i, 0)),  # x row tile
            pl.BlockSpec((C, th), lambda i, k: (0, k)),  # W1 hidden tile
            pl.BlockSpec((1, th), lambda i, k: (0, k)),  # b1 hidden tile
            pl.BlockSpec((th, C), lambda i, k: (k, 0)),  # W2 hidden tile
            pl.BlockSpec((1, C),  lambda i, k: (0, 0)),  # b2
        ]
        out_specs = pl.BlockSpec((tm, C), lambda i, k: (i, 0))
        if out_dtype == jnp.float32:
            kernel = ffn_tiled_accout_kernel             # accumulate into o_ref
            scratch = []
        else:
            kernel = ffn_tiled_scratch_kernel
            scratch = [pltpu.VMEM((tm, C), jnp.float32)]
        dim_sem = ("parallel", "arbitrary")

    out = pl.pallas_call(
        kernel,
        out_shape=jax.ShapeDtypeStruct((Mp, C), out_dtype),
        grid_spec=pltpu.PrefetchScalarGridSpec(
            num_scalar_prefetch=0,
            grid=grid,
            in_specs=in_specs,
            out_specs=out_specs,
            scratch_shapes=scratch,
        ),
        compiler_params=pltpu.CompilerParams(
            dimension_semantics=dim_sem,
            vmem_limit_bytes=vmem_limit,
        ),
        cost_estimate=cost,
    )(x2, w1c, b1_2, w2c, b2_2)

    if Mp != M:
        out = out[:M]
    return out.reshape(B, T, C)


# --------------------------------------------------------------------------
# Init / reference / tests
# --------------------------------------------------------------------------
def init_params(key, n_embeddings):
    """Deterministic init mimicking nn.Linear defaults (uniform +/- 1/sqrt(fan_in))."""
    C = n_embeddings
    H = 4 * C
    k1, k2, k3, k4 = jax.random.split(key, 4)
    lim1 = 1.0 / jnp.sqrt(C)
    lim2 = 1.0 / jnp.sqrt(H)
    w1 = jax.random.uniform(k1, (C, H), jnp.float32, -lim1, lim1)
    b1 = jax.random.uniform(k2, (H,), jnp.float32, -lim1, lim1)
    w2 = jax.random.uniform(k3, (H, C), jnp.float32, -lim2, lim2)
    b2 = jax.random.uniform(k4, (C,), jnp.float32, -lim2, lim2)
    return w1, b1, w2, b2


def ref_ffn_bf16(x, w1, b1, w2, b2):
    """Reference with the same bf16-operand / f32-accumulate math as the kernel."""
    B, T, C = x.shape
    x2 = x.reshape(-1, C)
    h = jnp.dot(x2.astype(jnp.bfloat16), w1.astype(jnp.bfloat16),
                preferred_element_type=jnp.float32)
    h = jnp.maximum(h + b1.astype(jnp.float32), 0.0)
    y = jnp.dot(h.astype(jnp.bfloat16), w2.astype(jnp.bfloat16),
                preferred_element_type=jnp.float32) + b2.astype(jnp.float32)
    return y.reshape(B, T, C)


if __name__ == "__main__":
    key = jax.random.PRNGKey(0)

    # ---- Test 1: small shapes, weight-resident fast path ------------------
    B, T, C = 2, 8, 32                  # n_embeddings=32, hidden=128
    kx, kp = jax.random.split(key)
    x = jax.random.normal(kx, (B, T, C), jnp.float32)
    w1, b1, w2, b2 = init_params(kp, C)
    # Pre-cast weights to bf16 once (outside the hot path), per review.
    w1b, w2b = w1.astype(jnp.bfloat16), w2.astype(jnp.bfloat16)

    out = jax.block_until_ready(feed_forward(x, w1b, b1, w2b, b2))
    ref = ref_ffn_bf16(x, w1, b1, w2, b2)
    assert jnp.allclose(out, ref, atol=1e-3, rtol=1e-3), "T1: mismatch vs bf16 ref"
    ref_f32 = (jnp.maximum(x.reshape(-1, C) @ w1 + b1, 0.0) @ w2 + b2).reshape(B, T, C)
    assert jnp.allclose(out, ref_f32, atol=3e-2, rtol=3e-2), "T1: mismatch vs f32 ref"

    # ---- Test 2: forced hidden-tiled path, f32 out (accumulate into o_ref) -
    B2, T2, C2 = 2, 64, 64              # hidden=256, th=128 -> kt=2
    kx2, kp2 = jax.random.split(jax.random.PRNGKey(0), 2)
    x2 = jax.random.normal(kx2, (B2, T2, C2), jnp.float32)
    w1_, b1_, w2_, b2_ = init_params(kp2, C2)
    out2 = jax.block_until_ready(
        feed_forward(x2, w1_.astype(jnp.bfloat16), b1_, w2_.astype(jnp.bfloat16), b2_,
                     force_weight_tiling=True, th_max=128))
    ref2 = ref_ffn_bf16(x2, w1_, b1_, w2_, b2_)
    assert jnp.allclose(out2, ref2, atol=2e-3, rtol=2e-3), "T2: mismatch (tiled f32)"

    # ---- Test 3: forced hidden-tiled path, bf16 out (scratch accumulator) --
    out3 = jax.block_until_ready(
        feed_forward(x2.astype(jnp.bfloat16), w1_.astype(jnp.bfloat16), b1_,
                     w2_.astype(jnp.bfloat16), b2_,
                     force_weight_tiling=True, th_max=128))
    assert jnp.allclose(out3.astype(jnp.float32), ref2, atol=1e-1, rtol=5e-2), \
        "T3: mismatch (tiled bf16 out)"

    # ---- Test 4: larger M -> >=2 parallel row tiles (megacore split) -------
    B4, T4, C4 = 4, 256, 64             # M=1024 -> mt>=2
    kx4, kp4 = jax.random.split(jax.random.PRNGKey(0), 2)
    x4 = jax.random.normal(kx4, (B4, T4, C4), jnp.float32)
    w1f, b1f, w2f, b2f = init_params(kp4, C4)
    out4 = jax.block_until_ready(
        feed_forward(x4, w1f.astype(jnp.bfloat16), b1f, w2f.astype(jnp.bfloat16), b2f))
    ref4 = ref_ffn_bf16(x4, w1f, b1f, w2f, b2f)
    assert jnp.allclose(out4, ref4, atol=2e-3, rtol=2e-3), "T4: mismatch (multi row-tile)"

    print("KERNEL_OK")
</pallas_src>

<mosaic_0001>
module attributes {stable_mosaic.version = 11 : i64} {
  func.func @ffn_resident_kernel(%arg0: i32, %arg1: memref<16x32xbf16, #tpu.memory_space<vmem>>, %arg2: memref<32x128xbf16, #tpu.memory_space<vmem>>, %arg3: memref<1x128xf32, #tpu.memory_space<vmem>>, %arg4: memref<128x32xbf16, #tpu.memory_space<vmem>>, %arg5: memref<1x32xf32, #tpu.memory_space<vmem>>, %arg6: memref<16x32xf32, #tpu.memory_space<vmem>>) attributes {dimension_semantics = [#tpu.dimension_semantics<parallel>], iteration_bounds = array<i64: 1>, scalar_prefetch = 0 : i64, scratch_operands = 0 : i64, tpu.core_type = #tpu.core_type<tc>, window_params = [{transform_indices = @transform_0, window_bounds = array<i64: 16, 32>}, {pipeline_mode = #tpu.pipeline_mode<synchronous>, transform_indices = @transform_1, window_bounds = array<i64: 32, 128>}, {pipeline_mode = #tpu.pipeline_mode<synchronous>, transform_indices = @transform_2, window_bounds = array<i64: 1, 128>}, {pipeline_mode = #tpu.pipeline_mode<synchronous>, transform_indices = @transform_3, window_bounds = array<i64: 128, 32>}, {pipeline_mode = #tpu.pipeline_mode<synchronous>, transform_indices = @transform_4, window_bounds = array<i64: 1, 32>}, {transform_indices = @transform_5, window_bounds = array<i64: 16, 32>}]} {
    %c0 = arith.constant 0 : index
    %c0_0 = arith.constant 0 : index
    %0 = vector.load %arg1[%c0, %c0_0] : memref<16x32xbf16, #tpu.memory_space<vmem>>, vector<16x32xbf16>
    %c0_1 = arith.constant 0 : index
    %c0_2 = arith.constant 0 : index
    %1 = vector.load %arg2[%c0_1, %c0_2] : memref<32x128xbf16, #tpu.memory_space<vmem>>, vector<32x128xbf16>
    %cst = arith.constant dense<0.000000e+00> : vector<16x128xf32>
    %2 = tpu.matmul %0, %1, %cst {dimension_numbers = #tpu.dot_dimension_numbers<[1], [0], [0], [1], [0, 0, 1, 1], [], []>} : vector<16x32xbf16>, vector<32x128xbf16>, vector<16x128xf32> -> vector<16x128xf32>
    %c0_3 = arith.constant 0 : index
    %c0_4 = arith.constant 0 : index
    %3 = vector.load %arg3[%c0_3, %c0_4] : memref<1x128xf32, #tpu.memory_space<vmem>>, vector<1x128xf32>
    %4 = vector.broadcast %3 : vector<1x128xf32> to vector<16x128xf32>
    %5 = arith.addf %2, %4 : vector<16x128xf32>
    %cst_5 = arith.constant 0.000000e+00 : f32
    %6 = vector.broadcast %cst_5 : f32 to vector<16x128xf32>
    %7 = arith.maximumf %5, %6 : vector<16x128xf32>
    %8 = arith.truncf %7 : vector<16x128xf32> to vector<16x128xbf16>
    %c0_6 = arith.constant 0 : index
    %c0_7 = arith.constant 0 : index
    %9 = vector.load %arg4[%c0_6, %c0_7] : memref<128x32xbf16, #tpu.memory_space<vmem>>, vector<128x32xbf16>
    %cst_8 = arith.constant dense<0.000000e+00> : vector<16x32xf32>
    %10 = tpu.matmul %8, %9, %cst_8 {dimension_numbers = #tpu.dot_dimension_numbers<[1], [0], [0], [1], [0, 0, 1, 1], [], []>} : vector<16x128xbf16>, vector<128x32xbf16>, vector<16x32xf32> -> vector<16x32xf32>
    %c0_9 = arith.constant 0 : index
    %c0_10 = arith.constant 0 : index
    %11 = vector.load %arg5[%c0_9, %c0_10] : memref<1x32xf32, #tpu.memory_space<vmem>>, vector<1x32xf32>
    %12 = vector.broadcast %11 : vector<1x32xf32> to vector<16x32xf32>
    %13 = arith.addf %10, %12 : vector<16x32xf32>
    %c0_11 = arith.constant 0 : index
    %c0_12 = arith.constant 0 : index
    %14 = vector.load %arg6[%c0_11, %c0_12] : memref<16x32xf32, #tpu.memory_space<vmem>>, vector<16x32xf32>
    tpu.vector_store %arg6[%c0_11, %c0_12], %13 {strides = array<i32>} : memref<16x32xf32, #tpu.memory_space<vmem>>, vector<16x32xf32>,
    return
  }
  func.func @transform_0(%arg0: i32) -> (i32, i32) {
    %c0_i32 = arith.constant 0 : i32
    %c0_i32_0 = arith.constant 0 : i32
    return %arg0, %c0_i32 : i32, i32
  }
  func.func @transform_1(%arg0: i32) -> (i32, i32) {
    %c0_i32 = arith.constant 0 : i32
    %c0_i32_0 = arith.constant 0 : i32
    %c0_i32_1 = arith.constant 0 : i32
    return %c0_i32, %c0_i32_0 : i32, i32
  }
  func.func @transform_2(%arg0: i32) -> (i32, i32) {
    %c0_i32 = arith.constant 0 : i32
    %c0_i32_0 = arith.constant 0 : i32
    %c0_i32_1 = arith.constant 0 : i32
    return %c0_i32, %c0_i32_0 : i32, i32
  }
  func.func @transform_3(%arg0: i32) -> (i32, i32) {
    %c0_i32 = arith.constant 0 : i32
    %c0_i32_0 = arith.constant 0 : i32
    %c0_i32_1 = arith.constant 0 : i32
    return %c0_i32, %c0_i32_0 : i32, i32
  }
  func.func @transform_4(%arg0: i32) -> (i32, i32) {
    %c0_i32 = arith.constant 0 : i32
    %c0_i32_0 = arith.constant 0 : i32
    %c0_i32_1 = arith.constant 0 : i32
    return %c0_i32, %c0_i32_0 : i32, i32
  }
  func.func @transform_5(%arg0: i32) -> (i32, i32) {
    %c0_i32 = arith.constant 0 : i32
    %c0_i32_0 = arith.constant 0 : i32
    return %arg0, %c0_i32 : i32, i32
  }
}

</mosaic_0001>

<llo_original>
// kernel: tpu_custom_call.1
$region0: #{tpu_custom_call.1}
  #allocation0 [shape = 'u32[]', space=smem, size = 0x4, offset = 0x4, fixed_abs, tag = 'smem constant byte address 0x4 - core index']
  #allocation1 [shape = 'u32[72,128]{1,0:T(1,128)}', space=vmem, size = 0x9000, scoped, tag = 'internal scratch']
  %s0 = inlined_call_operand.vmem [shape: bf16[16,32], index: 0, kind: input, shape index: {}]
  %s1 = inlined_call_operand.vmem [shape: bf16[32,128], index: 1, kind: input, shape index: {}]
  %s2 = inlined_call_operand.vmem [shape: f32[1,128], index: 2, kind: input, shape index: {}]
  %s3 = inlined_call_operand.vmem [shape: bf16[128,32], index: 3, kind: input, shape index: {}]
  %s4 = inlined_call_operand.vmem [shape: f32[1,32], index: 4, kind: input, shape index: {}]
  %s5 = inlined_call_operand.hbm [shape: f32[16,32], index: 5, kind: output, shape index: {}]
  %s6 = sld [smem:[#allocation0]]
  $region30: #{tpu_custom_call.1} parent=0
    _
  %s8 = ssub.s32 1, %s6
  %s9 = scalar_select 0, %s8, %s6
  $region1: #{tpu_custom_call.1} parent=0
    #allocation2 [shape = 'u8[8192]{0}', space=vmem, size = 0x2000, scoped, tag = 'output window, operand 0, single buffered']
    #allocation3 [shape = 's32[1]{0}', space=sflag, size = 0x4, scoped, tag = 'scoped memory for tpu_custom_call.1']
    %10 = vsyncpa [#allocation3], 0
    // Predicated region
    $region2: #{tpu_custom_call.1} parent=1 // pred_check
      _
    $region3: #{tpu_custom_call.1} parent=1 // pred_check_branch
      %12 = sbr.rel (0) target = $region5
    $region4: #{tpu_custom_call.1} parent=1 // pred_region
      _
    $region5: #{tpu_custom_call.1} parent=1 // pred_fallthru
      _
    // Predicated region
    $region6: #{tpu_custom_call.1} parent=1 // pred_check
      _
    $region7: #{tpu_custom_call.1} parent=1 // pred_check_branch
      %14 = sbr.rel (0) target = $region9
    $region8: #{tpu_custom_call.1} parent=1 // pred_region
      _
    $region9: #{tpu_custom_call.1} parent=1 // pred_fallthru
      _
    // Predicated region
    $region10: #{tpu_custom_call.1} parent=1 // pred_check
      _
    $region11: #{tpu_custom_call.1} parent=1 // pred_check_branch
      %16 = sbr.rel (0) target = $region13
    $region12: #{tpu_custom_call.1} parent=1 // pred_region
      _
    $region13: #{tpu_custom_call.1} parent=1 // pred_fallthru
      _
    // Predicated region
    $region14: #{tpu_custom_call.1} parent=1 // pred_check
      _
    $region15: #{tpu_custom_call.1} parent=1 // pred_check_branch
      %18 = sbr.rel (0) target = $region17
    $region16: #{tpu_custom_call.1} parent=1 // pred_region
      _
    $region17: #{tpu_custom_call.1} parent=1 // pred_fallthru
      _
    // Predicated region
    $region18: #{tpu_custom_call.1} parent=1 // pred_check
      _
    $region19: #{tpu_custom_call.1} parent=1 // pred_check_branch
      %20 = sbr.rel (0) target = $region21
    $region20: #{tpu_custom_call.1} parent=1 // pred_region
      _
    $region21: #{tpu_custom_call.1} parent=1 // pred_fallthru
      _
    %v22 = vld [vmem:[%s0] sm:$0xf]
    %v23 = vld [vmem:[%s0 + $0x4] sm:$0xf]
    %v24 = vld [vmem:[%s1] sm:$0xf]
    %v25 = vld [vmem:[%s1 + $0x4] sm:$0xf]
    %v26 = vld [vmem:[%s1 + $0x8] sm:$0xf]
    %v27 = vld [vmem:[%s1 + $0xc] sm:$0xf]
    %v28 = vld [vmem:[%s2] sm:$0x1]
    %v30 = vperm.slane %v28, 0
    %v34 = vunpack.c.l.b16 %v22
    %v35 = vunpack.c.l.b16 %v23
    %v36 = vpack.c.b16 %v35, %v34
    %v41 = vunpack.c.l.b16 %v24
    %v42 = vunpack.c.l.b16 %v25
    %v43 = vunpack.c.l.b16 %v26
    %v44 = vunpack.c.l.b16 %v27
    %v45 = vpack.c.b16 %v42, %v41
    %v46 = vpack.c.b16 %v44, %v43
    %vm49 = vcmask 261120
    %v51 = vsel %vm49, %v36, 0
    %53 = vmatpush.bf16.msra.mxu0 0
    %54 = vmatpush.bf16.msra.mxu0 0
    %55 = vmatpush.bf16.msra.mxu0 0
    %56 = vmatpush.bf16.msra.mxu0 0
    %57 = vmatpush.bf16.msra.mxu0 0
    %58 = vmatpush.bf16.msra.mxu0 0
    %59 = vmatpush.bf16.msra.mxu0 %v46
    %60 = vmatpush.bf16.msra.mxu0 %v45
    %61 = vmatmul.bf16.gmra.mxu0 %v51
    %v62 = vpop.f32.mrf.mxu0
    %v63 = vadd.f32 %v30, %v62
    %v64 = vpop.f32.mrf.mxu0
    %v65 = vadd.f32 %v30, %v64
    %66 = vdwg.mxu0
    %v67 = vmax.f32 %v63, 0.0
    %v68 = vmax.f32 %v65, 0.0
    %v69 = vpack.c.bf16 %v68, %v67
    %v70 = vld [vmem:[%s3] sm:$0xf]
    %v71 = vld [vmem:[%s3 + $0x4] sm:$0xf]
    %v72 = vld [vmem:[%s3 + $0x8] sm:$0xf]
    %v73 = vld [vmem:[%s3 + $0xc] sm:$0xf]
    %v74 = vld [vmem:[%s3 + $0x10] sm:$0xf]
    %v75 = vld [vmem:[%s3 + $0x14] sm:$0xf]
    %v76 = vld [vmem:[%s3 + $0x18] sm:$0xf]
    %v77 = vld [vmem:[%s3 + $0x1c] sm:$0xf]
    %v78 = vld [vmem:[%s3 + $0x20] sm:$0xf]
    %v79 = vld [vmem:[%s3 + $0x24] sm:$0xf]
    %v80 = vld [vmem:[%s3 + $0x28] sm:$0xf]
    %v81 = vld [vmem:[%s3 + $0x2c] sm:$0xf]
    %v82 = vld [vmem:[%s3 + $0x30] sm:$0xf]
    %v83 = vld [vmem:[%s3 + $0x34] sm:$0xf]
    %v84 = vld [vmem:[%s3 + $0x38] sm:$0xf]
    %v85 = vld [vmem:[%s3 + $0x3c] sm:$0xf]
    %v86 = vld [vmem:[%s4] sm:$0x1]
    %v88 = vperm.slane %v86, 0
    %v106 = vunpack.c.l.b16 %v70
    %v107 = vunpack.c.l.b16 %v71
    %v108 = vunpack.c.l.b16 %v72
    %v109 = vunpack.c.l.b16 %v73
    %v110 = vunpack.c.l.b16 %v74
    %v111 = vunpack.c.l.b16 %v75
    %v112 = vunpack.c.l.b16 %v76
    %v113 = vunpack.c.l.b16 %v77
    %v114 = vunpack.c.l.b16 %v78
    %v115 = vunpack.c.l.b16 %v79
    %v116 = vunpack.c.l.b16 %v80
    %v117 = vunpack.c.l.b16 %v81
    %v118 = vunpack.c.l.b16 %v82
    %v119 = vunpack.c.l.b16 %v83
    %v120 = vunpack.c.l.b16 %v84
    %v121 = vunpack.c.l.b16 %v85
    %v122 = vpack.c.b16 %v107, %v106
    %v123 = vpack.c.b16 %v109, %v108
    %v124 = vpack.c.b16 %v111, %v110
    %v125 = vpack.c.b16 %v113, %v112
    %v126 = vpack.c.b16 %v115, %v114
    %v127 = vpack.c.b16 %v117, %v116
    %v128 = vpack.c.b16 %v119, %v118
    %v129 = vpack.c.b16 %v121, %v120
    %138 = vmatpush.bf16.msra.mxu0 %v129
    %139 = vmatpush.bf16.msra.mxu0 %v128
    %140 = vmatpush.bf16.msra.mxu0 %v127
    %141 = vmatpush.bf16.msra.mxu0 %v126
    %142 = vmatpush.bf16.msra.mxu0 %v125
    %143 = vmatpush.bf16.msra.mxu0 %v124
    %144 = vmatpush.bf16.msra.mxu0 %v123
    %145 = vmatpush.bf16.msra.mxu0 %v122
    %146 = vmatmul.bf16.gmra.mxu0 %v69
    %v147 = vpop.f32.mrf.mxu0
    %v148 = vadd.f32 %v88, %v147
    %v149 = vpop.f32.mrf.mxu0
    %v150 = vadd.f32 %v88, %v149
    %151 = vdwg.mxu0
    %152 = vst.msk [vmem:[#allocation2] sm:$0xff] %vm49, %v148
    %153 = vst.msk [vmem:[#allocation2 + $0x8] sm:$0xff] %vm49, %v150
    // Predicated region
    $region22: #{tpu_custom_call.1} parent=1 // pred_check
      _
    $region23: #{tpu_custom_call.1} parent=1 // pred_check_branch
      %155 = sbr.rel (0) target = $region25
    $region24: #{tpu_custom_call.1} parent=1 // pred_region
      %157 = vsyncadd [#allocation3], 0
      %s158 = sshll.u32 [#allocation2], 4
      %s159 = int_to_ptr.vmem [resolvable:$true] %s158
      %s160 = sshll.u32 %s5, 4
      %s161 = int_to_ptr.hbm [resolvable:$true] %s160
      %166 = dma.vmem_to_hbm [thread:$0]  %s159, 256, %s161, [#allocation3], 128, 128, 8
    $region25: #{tpu_custom_call.1} parent=1 // pred_fallthru
      _
    // Predicated region
    $region26: #{tpu_custom_call.1} parent=1 // pred_check
      _
    $region27: #{tpu_custom_call.1} parent=1 // pred_check_branch
      %168 = sbr.rel (0) target = $region29
    $region28: #{tpu_custom_call.1} parent=1 // pred_region
      %170 = dma.done [#allocation3], 256
    $region29: #{tpu_custom_call.1} parent=1 // pred_fallthru
      _
    %171 = vsyncpa [#allocation3], 1

</llo_original>
